<compile_context>
chip_gen: v5e
topology: v5e:2x2
jax: 0.10.0
libtpu: 0.0.40
codegen_flags: <defaults>
</compile_context>

<pallas_src>
import functools

import jax
import jax.numpy as jnp
from jax.experimental import pallas as pl
from jax.experimental.pallas import tpu as pltpu


def lstm_kernel(x_ref, w_ref, b_ref, out_ref, *,
                input_len, output_len, gb, hidden):
    """Encode + autoregressive decode for one batch group, fully VMEM-resident.

    x_ref   : (input_len*GB, input_size)   bf16   seq-major rows of this group
    w_ref   : (4, hidden, 4H)              bf16   [w_ih_t, w_hh_t, w_comb_t, w_out_pad]
                                                  (i/f/o cols pre-scaled by 0.5)
    b_ref   : (2, 4H)                      f32    [gate bias (scaled), out bias (padded)]
    out_ref : (output_len*GB, 4H)          f32    lane-dense; cols >= output_size unused
    """
    H = hidden
    B = gb
    T = input_len

    # ---- hoist all weight loads / bias broadcasts out of the recurrence ----
    w_ih = w_ref[0]                                      # (H, 4H) bf16
    w_hh = w_ref[1]
    w_comb = w_ref[2]
    w_out = w_ref[3]
    b_gate_row = b_ref[0:1, :]                           # (1, 4H) f32
    b_out_row = b_ref[1:2, :]                            # (1, 4H) f32
    b_gate = jnp.broadcast_to(b_gate_row, (B, 4 * H))    # broadcast once, reuse per step

    # ---- encode: all T input projections in ONE MXU matmul, off the serial chain ----
    pre_gates = jnp.dot(x_ref[...], w_ih,
                        preferred_element_type=jnp.float32) + b_gate_row  # (T*B, 4H)

    def gate_update(gates, c):
        # sigmoid(z) = 0.5*(tanh(z/2)+1); the /2 is pre-baked into the i/f/o weight
        # columns, so ONE full-vreg tanh covers all four gates.
        t = jnp.tanh(gates)                   # 1 EUP push on (B, 4H)
        sig = 0.5 * t + 0.5                   # VPU only
        i_g = sig[:, 0 * H:1 * H]
        f_g = sig[:, 1 * H:2 * H]
        g_g = t[:, 2 * H:3 * H]
        o_g = sig[:, 3 * H:4 * H]
        c = f_g * c + i_g * g_g
        h = o_g * jnp.tanh(c)                 # 2nd (and last) EUP push of the step
        return h, c

    # ---- encode recurrence (fully unrolled). Step 0: h == 0 -> skip h@w_hh. ----
    c0 = jnp.zeros((B, H), jnp.float32)
    h, c = gate_update(pre_gates[0:B, :], c0)
    for t_step in range(1, T):
        gates = pre_gates[t_step * B:(t_step + 1) * B, :] + jnp.dot(
            h.astype(jnp.bfloat16), w_hh, preferred_element_type=jnp.float32)
        h, c = gate_update(gates, c)

    # ---- decode recurrence: input == h, so one fused matmul per step ----
    hs = []
    for _ in range(output_len):
        gates = jnp.dot(h.astype(jnp.bfloat16), w_comb,
                        preferred_element_type=jnp.float32) + b_gate
        h, c = gate_update(gates, c)
        hs.append(h)

    # ---- single batched output projection + sigmoid (tanh form) + one dense store ----
    h_all = jnp.concatenate(hs, axis=0).astype(jnp.bfloat16)         # (out_len*B, H)
    y = 0.5 * jnp.tanh(
        jnp.dot(h_all, w_out, preferred_element_type=jnp.float32) + b_out_row) + 0.5
    out_ref[...] = y.astype(out_ref.dtype)


def lstm_forward(x, w_ih, w_hh, b_ih, b_hh, w_out, b_out, *,
                 output_len, group_batch=8):
    """Wrapper: parameter packing / padding (glue) in plain JAX, compute in Pallas."""
    input_len, batch, input_size = x.shape
    hidden = w_hh.shape[1]
    output_size = w_out.shape[0]
    four_h = 4 * hidden
    assert input_size == hidden, "autoregressive feedback needs input_size == hidden_size"
    assert output_size <= four_h, "output projection is packed into the 4H lane block"

    # Pad batch to a multiple of one f32 sublane group and split into groups: each
    # grid program handles GB independent sequences (parallel across TCs on v7x).
    GB = group_batch
    b_pad = -(-batch // GB) * GB
    n_groups = b_pad // GB
    if b_pad != batch:
        x = jnp.pad(x, ((0, 0), (0, b_pad - batch), (0, 0)))

    # sigmoid-as-tanh pre-scale: i/f/o columns (and matching fused-bias entries) x 0.5.
    # 0.5 is a power of two, so this is exact and adds no rounding beyond the bf16 cast.
    col_scale = jnp.concatenate([
        jnp.full((hidden,), 0.5, jnp.float32),   # i
        jnp.full((hidden,), 0.5, jnp.float32),   # f
        jnp.ones((hidden,), jnp.float32),        # g (tanh gate, unscaled)
        jnp.full((hidden,), 0.5, jnp.float32),   # o
    ])

    w_ih_t = jnp.asarray(w_ih, jnp.float32).T * col_scale      # (H, 4H)
    w_hh_t = jnp.asarray(w_hh, jnp.float32).T * col_scale      # (H, 4H)
    w_comb_t = w_ih_t + w_hh_t                                  # decode fusion (input==h)
    b_gate = (jnp.asarray(b_ih, jnp.float32)
              + jnp.asarray(b_hh, jnp.float32)) * col_scale     # (4H,)

    # Output projection padded to 4H lanes (lane-dense store) + 0.5 tanh-sigmoid scale.
    w_out_t = jnp.zeros((hidden, four_h), jnp.float32).at[:, :output_size].set(
        0.5 * jnp.asarray(w_out, jnp.float32).T)
    b_out_p = jnp.zeros((four_h,), jnp.float32).at[:output_size].set(
        0.5 * jnp.asarray(b_out, jnp.float32))

    # Pack: ONE weight array, ONE bias array -> 3 input DMAs total.
    w_all = jnp.stack([w_ih_t, w_hh_t, w_comb_t, w_out_t]).astype(jnp.bfloat16)  # (4,H,4H)
    b_all = jnp.stack([b_gate, b_out_p])                                         # (2,4H)

    # x: (T, B_pad, C) -> (n_groups, T*GB, C), seq-major inside each group.
    x_g = (x.reshape(input_len, n_groups, GB, input_size)
             .transpose(1, 0, 2, 3)
             .reshape(n_groups, input_len * GB, input_size)
             .astype(jnp.bfloat16))

    kernel = functools.partial(lstm_kernel, input_len=input_len,
                               output_len=output_len, gb=GB, hidden=hidden)

    out = pl.pallas_call(
        kernel,
        out_shape=jax.ShapeDtypeStruct((n_groups, output_len * GB, four_h), jnp.float32),
        grid=(n_groups,),
        in_specs=[
            pl.BlockSpec((None, input_len * GB, input_size), lambda g: (g, 0, 0)),
            pl.BlockSpec((4, hidden, four_h), lambda g: (0, 0, 0)),
            pl.BlockSpec((2, four_h), lambda g: (0, 0)),
        ],
        out_specs=pl.BlockSpec((None, output_len * GB, four_h), lambda g: (g, 0, 0)),
        compiler_params=pltpu.CompilerParams(
            dimension_semantics=("parallel",)),
    )(x_g, w_all, b_all)

    # (n_groups, out_len*GB, 4H) -> (out_len, batch, output_size)
    out = (out.reshape(n_groups, output_len, GB, four_h)
              .transpose(1, 0, 2, 3)
              .reshape(output_len, b_pad, four_h))
    return out[:, :batch, :output_size]


def lstm_ref(x, w_ih, w_hh, b_ih, b_hh, w_out, b_out, *, output_len):
    """Pure-JAX f32 reference mirroring the PyTorch forward."""
    T, B, _ = x.shape
    H = w_hh.shape[1]

    def cell(x_t, h, c):
        g = x_t @ w_ih.T + b_ih + h @ w_hh.T + b_hh
        i = jax.nn.sigmoid(g[:, :H])
        f = jax.nn.sigmoid(g[:, H:2 * H])
        gg = jnp.tanh(g[:, 2 * H:3 * H])
        o = jax.nn.sigmoid(g[:, 3 * H:])
        c = f * c + i * gg
        h = o * jnp.tanh(c)
        return h, c

    h = jnp.zeros((B, H), jnp.float32)
    c = jnp.zeros((B, H), jnp.float32)
    for t in range(T):
        h, c = cell(x[t], h, c)
    outs = []
    for _ in range(output_len):
        h, c = cell(h, h, c)
        outs.append(jax.nn.sigmoid(h @ w_out.T + b_out))
    return jnp.stack(outs, 0)


if __name__ == "__main__":
    # Small shapes consistent with the module: seq-first input (T, B, C).
    INPUT_LEN = 8
    OUTPUT_LEN = 4
    BATCH = 2
    INPUT_SIZE = 32   # == hidden_size, as the module's feedback loop requires
    HIDDEN = 32
    OUTPUT_SIZE = 32

    key = jax.random.PRNGKey(0)
    kx, k1, k2, k3, k4, k5, k6 = jax.random.split(key, 7)
    bound = 1.0 / jnp.sqrt(HIDDEN)

    x = jax.random.normal(kx, (INPUT_LEN, BATCH, INPUT_SIZE), jnp.float32)
    # PyTorch LSTM param shapes: weight_ih (4H, in), weight_hh (4H, H), biases (4H,)
    w_ih = jax.random.uniform(k1, (4 * HIDDEN, INPUT_SIZE), jnp.float32, -bound, bound)
    w_hh = jax.random.uniform(k2, (4 * HIDDEN, HIDDEN), jnp.float32, -bound, bound)
    b_ih = jax.random.uniform(k3, (4 * HIDDEN,), jnp.float32, -bound, bound)
    b_hh = jax.random.uniform(k4, (4 * HIDDEN,), jnp.float32, -bound, bound)
    # Linear layer: weight (out, in), bias (out,)
    w_out = jax.random.uniform(k5, (OUTPUT_SIZE, HIDDEN), jnp.float32, -bound, bound)
    b_out = jax.random.uniform(k6, (OUTPUT_SIZE,), jnp.float32, -bound, bound)

    out = lstm_forward(x, w_ih, w_hh, b_ih, b_hh, w_out, b_out,
                       output_len=OUTPUT_LEN)
    out = jax.block_until_ready(out)

    ref = lstm_ref(x, w_ih, w_hh, b_ih, b_hh, w_out, b_out,
                   output_len=OUTPUT_LEN)
    assert out.shape == (OUTPUT_LEN, BATCH, OUTPUT_SIZE)
    # bf16 MXU operands (f32 accumulation) -> slightly looser tolerance than pure f32.
    assert jnp.allclose(out, ref, atol=2e-2, rtol=2e-2), "mismatch vs JAX reference"

    print("KERNEL_OK")
</pallas_src>

<mosaic_0001>
module attributes {stable_mosaic.version = 11 : i64} {
  func.func @lstm_kernel(%arg0: i32, %arg1: memref<1x64x32xbf16, #tpu.memory_space<vmem>>, %arg2: memref<4x32x128xbf16, #tpu.memory_space<vmem>>, %arg3: memref<2x128xf32, #tpu.memory_space<vmem>>, %arg4: memref<1x32x128xf32, #tpu.memory_space<vmem>>) attributes {dimension_semantics = [#tpu.dimension_semantics<parallel>], iteration_bounds = array<i64: 1>, scalar_prefetch = 0 : i64, scratch_operands = 0 : i64, tpu.core_type = #tpu.core_type<tc>, window_params = [{transform_indices = @transform_0, window_bounds = array<i64: 1, 64, 32>}, {pipeline_mode = #tpu.pipeline_mode<synchronous>, transform_indices = @transform_1, window_bounds = array<i64: 4, 32, 128>}, {pipeline_mode = #tpu.pipeline_mode<synchronous>, transform_indices = @transform_2, window_bounds = array<i64: 2, 128>}, {transform_indices = @transform_3, window_bounds = array<i64: 1, 32, 128>}]} {
    %c0 = arith.constant 0 : index
    %c0_0 = arith.constant 0 : index
    %c0_1 = arith.constant 0 : index
    %0 = vector.load %arg2[%c0, %c0_0, %c0_1] : memref<4x32x128xbf16, #tpu.memory_space<vmem>>, vector<1x32x128xbf16>
    %1 = vector.shape_cast %0 : vector<1x32x128xbf16> to vector<32x128xbf16>
    %c1 = arith.constant 1 : index
    %c0_2 = arith.constant 0 : index
    %c0_3 = arith.constant 0 : index
    %2 = vector.load %arg2[%c1, %c0_2, %c0_3] : memref<4x32x128xbf16, #tpu.memory_space<vmem>>, vector<1x32x128xbf16>
    %3 = vector.shape_cast %2 : vector<1x32x128xbf16> to vector<32x128xbf16>
    %c2 = arith.constant 2 : index
    %c0_4 = arith.constant 0 : index
    %c0_5 = arith.constant 0 : index
    %4 = vector.load %arg2[%c2, %c0_4, %c0_5] : memref<4x32x128xbf16, #tpu.memory_space<vmem>>, vector<1x32x128xbf16>
    %5 = vector.shape_cast %4 : vector<1x32x128xbf16> to vector<32x128xbf16>
    %c3 = arith.constant 3 : index
    %c0_6 = arith.constant 0 : index
    %c0_7 = arith.constant 0 : index
    %6 = vector.load %arg2[%c3, %c0_6, %c0_7] : memref<4x32x128xbf16, #tpu.memory_space<vmem>>, vector<1x32x128xbf16>
    %7 = vector.shape_cast %6 : vector<1x32x128xbf16> to vector<32x128xbf16>
    %c0_8 = arith.constant 0 : index
    %c0_9 = arith.constant 0 : index
    %8 = vector.load %arg3[%c0_8, %c0_9] : memref<2x128xf32, #tpu.memory_space<vmem>>, vector<1x128xf32>
    %c1_10 = arith.constant 1 : index
    %c0_11 = arith.constant 0 : index
    %9 = vector.load %arg3[%c1_10, %c0_11] : memref<2x128xf32, #tpu.memory_space<vmem>>, vector<1x128xf32>
    %10 = vector.shape_cast %8 : vector<1x128xf32> to vector<1x128xf32>
    %11 = vector.broadcast %10 : vector<1x128xf32> to vector<8x128xf32>
    %c0_12 = arith.constant 0 : index
    %c0_13 = arith.constant 0 : index
    %c0_14 = arith.constant 0 : index
    %12 = vector.load %arg1[%c0_12, %c0_13, %c0_14] : memref<1x64x32xbf16, #tpu.memory_space<vmem>>, vector<1x64x32xbf16>
    %13 = vector.shape_cast %12 : vector<1x64x32xbf16> to vector<64x32xbf16>
    %cst = arith.constant dense<0.000000e+00> : vector<64x128xf32>
    %14 = tpu.matmul %13, %1, %cst {dimension_numbers = #tpu.dot_dimension_numbers<[1], [0], [0], [1], [0, 0, 1, 1], [], []>} : vector<64x32xbf16>, vector<32x128xbf16>, vector<64x128xf32> -> vector<64x128xf32>
    %15 = vector.broadcast %8 : vector<1x128xf32> to vector<64x128xf32>
    %16 = arith.addf %14, %15 : vector<64x128xf32>
    %cst_15 = arith.constant 0.000000e+00 : f32
    %17 = vector.broadcast %cst_15 : f32 to vector<8x32xf32>
    %18 = vector.extract_strided_slice %16 {offsets = [0, 0], sizes = [8, 128], strides = [1, 1]} : vector<64x128xf32> to vector<8x128xf32>
    %19 = math.tanh %18 : vector<8x128xf32>
    %cst_16 = arith.constant 5.000000e-01 : f32
    %20 = vector.broadcast %cst_16 : f32 to vector<8x128xf32>
    %21 = arith.mulf %20, %19 : vector<8x128xf32>
    %cst_17 = arith.constant 5.000000e-01 : f32
    %22 = vector.broadcast %cst_17 : f32 to vector<8x128xf32>
    %23 = arith.addf %21, %22 : vector<8x128xf32>
    %24 = vector.extract_strided_slice %23 {offsets = [0, 0], sizes = [8, 32], strides = [1, 1]} : vector<8x128xf32> to vector<8x32xf32>
    %25 = vector.extract_strided_slice %23 {offsets = [0, 32], sizes = [8, 32], strides = [1, 1]} : vector<8x128xf32> to vector<8x32xf32>
    %26 = vector.extract_strided_slice %19 {offsets = [0, 64], sizes = [8, 32], strides = [1, 1]} : vector<8x128xf32> to vector<8x32xf32>
    %27 = vector.extract_strided_slice %23 {offsets = [0, 96], sizes = [8, 32], strides = [1, 1]} : vector<8x128xf32> to vector<8x32xf32>
    %28 = arith.mulf %25, %17 : vector<8x32xf32>
    %29 = arith.mulf %24, %26 : vector<8x32xf32>
    %30 = arith.addf %28, %29 : vector<8x32xf32>
    %31 = math.tanh %30 : vector<8x32xf32>
    %32 = arith.mulf %27, %31 : vector<8x32xf32>
    %33 = vector.extract_strided_slice %16 {offsets = [8, 0], sizes = [8, 128], strides = [1, 1]} : vector<64x128xf32> to vector<8x128xf32>
    %34 = arith.truncf %32 : vector<8x32xf32> to vector<8x32xbf16>
    %cst_18 = arith.constant dense<0.000000e+00> : vector<8x128xf32>
    %35 = tpu.matmul %34, %3, %cst_18 {dimension_numbers = #tpu.dot_dimension_numbers<[1], [0], [0], [1], [0, 0, 1, 1], [], []>} : vector<8x32xbf16>, vector<32x128xbf16>, vector<8x128xf32> -> vector<8x128xf32>
    %36 = arith.addf %33, %35 : vector<8x128xf32>
    %37 = math.tanh %36 : vector<8x128xf32>
    %cst_19 = arith.constant 5.000000e-01 : f32
    %38 = vector.broadcast %cst_19 : f32 to vector<8x128xf32>
    %39 = arith.mulf %38, %37 : vector<8x128xf32>
    %cst_20 = arith.constant 5.000000e-01 : f32
    %40 = vector.broadcast %cst_20 : f32 to vector<8x128xf32>
    %41 = arith.addf %39, %40 : vector<8x128xf32>
    %42 = vector.extract_strided_slice %41 {offsets = [0, 0], sizes = [8, 32], strides = [1, 1]} : vector<8x128xf32> to vector<8x32xf32>
    %43 = vector.extract_strided_slice %41 {offsets = [0, 32], sizes = [8, 32], strides = [1, 1]} : vector<8x128xf32> to vector<8x32xf32>
    %44 = vector.extract_strided_slice %37 {offsets = [0, 64], sizes = [8, 32], strides = [1, 1]} : vector<8x128xf32> to vector<8x32xf32>
    %45 = vector.extract_strided_slice %41 {offsets = [0, 96], sizes = [8, 32], strides = [1, 1]} : vector<8x128xf32> to vector<8x32xf32>
    %46 = arith.mulf %43, %30 : vector<8x32xf32>
    %47 = arith.mulf %42, %44 : vector<8x32xf32>
    %48 = arith.addf %46, %47 : vector<8x32xf32>
    %49 = math.tanh %48 : vector<8x32xf32>
    %50 = arith.mulf %45, %49 : vector<8x32xf32>
    %51 = vector.extract_strided_slice %16 {offsets = [16, 0], sizes = [8, 128], strides = [1, 1]} : vector<64x128xf32> to vector<8x128xf32>
    %52 = arith.truncf %50 : vector<8x32xf32> to vector<8x32xbf16>
    %cst_21 = arith.constant dense<0.000000e+00> : vector<8x128xf32>
    %53 = tpu.matmul %52, %3, %cst_21 {dimension_numbers = #tpu.dot_dimension_numbers<[1], [0], [0], [1], [0, 0, 1, 1], [], []>} : vector<8x32xbf16>, vector<32x128xbf16>, vector<8x128xf32> -> vector<8x128xf32>
    %54 = arith.addf %51, %53 : vector<8x128xf32>
    %55 = math.tanh %54 : vector<8x128xf32>
    %cst_22 = arith.constant 5.000000e-01 : f32
    %56 = vector.broadcast %cst_22 : f32 to vector<8x128xf32>
    %57 = arith.mulf %56, %55 : vector<8x128xf32>
    %cst_23 = arith.constant 5.000000e-01 : f32
    %58 = vector.broadcast %cst_23 : f32 to vector<8x128xf32>
    %59 = arith.addf %57, %58 : vector<8x128xf32>
    %60 = vector.extract_strided_slice %59 {offsets = [0, 0], sizes = [8, 32], strides = [1, 1]} : vector<8x128xf32> to vector<8x32xf32>
    %61 = vector.extract_strided_slice %59 {offsets = [0, 32], sizes = [8, 32], strides = [1, 1]} : vector<8x128xf32> to vector<8x32xf32>
    %62 = vector.extract_strided_slice %55 {offsets = [0, 64], sizes = [8, 32], strides = [1, 1]} : vector<8x128xf32> to vector<8x32xf32>
    %63 = vector.extract_strided_slice %59 {offsets = [0, 96], sizes = [8, 32], strides = [1, 1]} : vector<8x128xf32> to vector<8x32xf32>
    %64 = arith.mulf %61, %48 : vector<8x32xf32>
    %65 = arith.mulf %60, %62 : vector<8x32xf32>
    %66 = arith.addf %64, %65 : vector<8x32xf32>
    %67 = math.tanh %66 : vector<8x32xf32>
    %68 = arith.mulf %63, %67 : vector<8x32xf32>
    %69 = vector.extract_strided_slice %16 {offsets = [24, 0], sizes = [8, 128], strides = [1, 1]} : vector<64x128xf32> to vector<8x128xf32>
    %70 = arith.truncf %68 : vector<8x32xf32> to vector<8x32xbf16>
    %cst_24 = arith.constant dense<0.000000e+00> : vector<8x128xf32>
    %71 = tpu.matmul %70, %3, %cst_24 {dimension_numbers = #tpu.dot_dimension_numbers<[1], [0], [0], [1], [0, 0, 1, 1], [], []>} : vector<8x32xbf16>, vector<32x128xbf16>, vector<8x128xf32> -> vector<8x128xf32>
    %72 = arith.addf %69, %71 : vector<8x128xf32>
    %73 = math.tanh %72 : vector<8x128xf32>
    %cst_25 = arith.constant 5.000000e-01 : f32
    %74 = vector.broadcast %cst_25 : f32 to vector<8x128xf32>
    %75 = arith.mulf %74, %73 : vector<8x128xf32>
    %cst_26 = arith.constant 5.000000e-01 : f32
    %76 = vector.broadcast %cst_26 : f32 to vector<8x128xf32>
    %77 = arith.addf %75, %76 : vector<8x128xf32>
    %78 = vector.extract_strided_slice %77 {offsets = [0, 0], sizes = [8, 32], strides = [1, 1]} : vector<8x128xf32> to vector<8x32xf32>
    %79 = vector.extract_strided_slice %77 {offsets = [0, 32], sizes = [8, 32], strides = [1, 1]} : vector<8x128xf32> to vector<8x32xf32>
    %80 = vector.extract_strided_slice %73 {offsets = [0, 64], sizes = [8, 32], strides = [1, 1]} : vector<8x128xf32> to vector<8x32xf32>
    %81 = vector.extract_strided_slice %77 {offsets = [0, 96], sizes = [8, 32], strides = [1, 1]} : vector<8x128xf32> to vector<8x32xf32>
    %82 = arith.mulf %79, %66 : vector<8x32xf32>
    %83 = arith.mulf %78, %80 : vector<8x32xf32>
    %84 = arith.addf %82, %83 : vector<8x32xf32>
    %85 = math.tanh %84 : vector<8x32xf32>
    %86 = arith.mulf %81, %85 : vector<8x32xf32>
    %87 = vector.extract_strided_slice %16 {offsets = [32, 0], sizes = [8, 128], strides = [1, 1]} : vector<64x128xf32> to vector<8x128xf32>
    %88 = arith.truncf %86 : vector<8x32xf32> to vector<8x32xbf16>
    %cst_27 = arith.constant dense<0.000000e+00> : vector<8x128xf32>
    %89 = tpu.matmul %88, %3, %cst_27 {dimension_numbers = #tpu.dot_dimension_numbers<[1], [0], [0], [1], [0, 0, 1, 1], [], []>} : vector<8x32xbf16>, vector<32x128xbf16>, vector<8x128xf32> -> vector<8x128xf32>
    %90 = arith.addf %87, %89 : vector<8x128xf32>
    %91 = math.tanh %90 : vector<8x128xf32>
    %cst_28 = arith.constant 5.000000e-01 : f32
    %92 = vector.broadcast %cst_28 : f32 to vector<8x128xf32>
    %93 = arith.mulf %92, %91 : vector<8x128xf32>
    %cst_29 = arith.constant 5.000000e-01 : f32
    %94 = vector.broadcast %cst_29 : f32 to vector<8x128xf32>
    %95 = arith.addf %93, %94 : vector<8x128xf32>
    %96 = vector.extract_strided_slice %95 {offsets = [0, 0], sizes = [8, 32], strides = [1, 1]} : vector<8x128xf32> to vector<8x32xf32>
    %97 = vector.extract_strided_slice %95 {offsets = [0, 32], sizes = [8, 32], strides = [1, 1]} : vector<8x128xf32> to vector<8x32xf32>
    %98 = vector.extract_strided_slice %91 {offsets = [0, 64], sizes = [8, 32], strides = [1, 1]} : vector<8x128xf32> to vector<8x32xf32>
    %99 = vector.extract_strided_slice %95 {offsets = [0, 96], sizes = [8, 32], strides = [1, 1]} : vector<8x128xf32> to vector<8x32xf32>
    %100 = arith.mulf %97, %84 : vector<8x32xf32>
    %101 = arith.mulf %96, %98 : vector<8x32xf32>
    %102 = arith.addf %100, %101 : vector<8x32xf32>
    %103 = math.tanh %102 : vector<8x32xf32>
    %104 = arith.mulf %99, %103 : vector<8x32xf32>
    %105 = vector.extract_strided_slice %16 {offsets = [40, 0], sizes = [8, 128], strides = [1, 1]} : vector<64x128xf32> to vector<8x128xf32>
    %106 = arith.truncf %104 : vector<8x32xf32> to vector<8x32xbf16>
    %cst_30 = arith.constant dense<0.000000e+00> : vector<8x128xf32>
    %107 = tpu.matmul %106, %3, %cst_30 {dimension_numbers = #tpu.dot_dimension_numbers<[1], [0], [0], [1], [0, 0, 1, 1], [], []>} : vector<8x32xbf16>, vector<32x128xbf16>, vector<8x128xf32> -> vector<8x128xf32>
    %108 = arith.addf %105, %107 : vector<8x128xf32>
    %109 = math.tanh %108 : vector<8x128xf32>
    %cst_31 = arith.constant 5.000000e-01 : f32
    %110 = vector.broadcast %cst_31 : f32 to vector<8x128xf32>
    %111 = arith.mulf %110, %109 : vector<8x128xf32>
    %cst_32 = arith.constant 5.000000e-01 : f32
    %112 = vector.broadcast %cst_32 : f32 to vector<8x128xf32>
    %113 = arith.addf %111, %112 : vector<8x128xf32>
    %114 = vector.extract_strided_slice %113 {offsets = [0, 0], sizes = [8, 32], strides = [1, 1]} : vector<8x128xf32> to vector<8x32xf32>
    %115 = vector.extract_strided_slice %113 {offsets = [0, 32], sizes = [8, 32], strides = [1, 1]} : vector<8x128xf32> to vector<8x32xf32>
    %116 = vector.extract_strided_slice %109 {offsets = [0, 64], sizes = [8, 32], strides = [1, 1]} : vector<8x128xf32> to vector<8x32xf32>
    %117 = vector.extract_strided_slice %113 {offsets = [0, 96], sizes = [8, 32], strides = [1, 1]} : vector<8x128xf32> to vector<8x32xf32>
    %118 = arith.mulf %115, %102 : vector<8x32xf32>
    %119 = arith.mulf %114, %116 : vector<8x32xf32>
    %120 = arith.addf %118, %119 : vector<8x32xf32>
    %121 = math.tanh %120 : vector<8x32xf32>
    %122 = arith.mulf %117, %121 : vector<8x32xf32>
    %123 = vector.extract_strided_slice %16 {offsets = [48, 0], sizes = [8, 128], strides = [1, 1]} : vector<64x128xf32> to vector<8x128xf32>
    %124 = arith.truncf %122 : vector<8x32xf32> to vector<8x32xbf16>
    %cst_33 = arith.constant dense<0.000000e+00> : vector<8x128xf32>
    %125 = tpu.matmul %124, %3, %cst_33 {dimension_numbers = #tpu.dot_dimension_numbers<[1], [0], [0], [1], [0, 0, 1, 1], [], []>} : vector<8x32xbf16>, vector<32x128xbf16>, vector<8x128xf32> -> vector<8x128xf32>
    %126 = arith.addf %123, %125 : vector<8x128xf32>
    %127 = math.tanh %126 : vector<8x128xf32>
    %cst_34 = arith.constant 5.000000e-01 : f32
    %128 = vector.broadcast %cst_34 : f32 to vector<8x128xf32>
    %129 = arith.mulf %128, %127 : vector<8x128xf32>
    %cst_35 = arith.constant 5.000000e-01 : f32
    %130 = vector.broadcast %cst_35 : f32 to vector<8x128xf32>
    %131 = arith.addf %129, %130 : vector<8x128xf32>
    %132 = vector.extract_strided_slice %131 {offsets = [0, 0], sizes = [8, 32], strides = [1, 1]} : vector<8x128xf32> to vector<8x32xf32>
    %133 = vector.extract_strided_slice %131 {offsets = [0, 32], sizes = [8, 32], strides = [1, 1]} : vector<8x128xf32> to vector<8x32xf32>
    %134 = vector.extract_strided_slice %127 {offsets = [0, 64], sizes = [8, 32], strides = [1, 1]} : vector<8x128xf32> to vector<8x32xf32>
    %135 = vector.extract_strided_slice %131 {offsets = [0, 96], sizes = [8, 32], strides = [1, 1]} : vector<8x128xf32> to vector<8x32xf32>
    %136 = arith.mulf %133, %120 : vector<8x32xf32>
    %137 = arith.mulf %132, %134 : vector<8x32xf32>
    %138 = arith.addf %136, %137 : vector<8x32xf32>
    %139 = math.tanh %138 : vector<8x32xf32>
    %140 = arith.mulf %135, %139 : vector<8x32xf32>
    %141 = vector.extract_strided_slice %16 {offsets = [56, 0], sizes = [8, 128], strides = [1, 1]} : vector<64x128xf32> to vector<8x128xf32>
    %142 = arith.truncf %140 : vector<8x32xf32> to vector<8x32xbf16>
    %cst_36 = arith.constant dense<0.000000e+00> : vector<8x128xf32>
    %143 = tpu.matmul %142, %3, %cst_36 {dimension_numbers = #tpu.dot_dimension_numbers<[1], [0], [0], [1], [0, 0, 1, 1], [], []>} : vector<8x32xbf16>, vector<32x128xbf16>, vector<8x128xf32> -> vector<8x128xf32>
    %144 = arith.addf %141, %143 : vector<8x128xf32>
    %145 = math.tanh %144 : vector<8x128xf32>
    %cst_37 = arith.constant 5.000000e-01 : f32
    %146 = vector.broadcast %cst_37 : f32 to vector<8x128xf32>
    %147 = arith.mulf %146, %145 : vector<8x128xf32>
    %cst_38 = arith.constant 5.000000e-01 : f32
    %148 = vector.broadcast %cst_38 : f32 to vector<8x128xf32>
    %149 = arith.addf %147, %148 : vector<8x128xf32>
    %150 = vector.extract_strided_slice %149 {offsets = [0, 0], sizes = [8, 32], strides = [1, 1]} : vector<8x128xf32> to vector<8x32xf32>
    %151 = vector.extract_strided_slice %149 {offsets = [0, 32], sizes = [8, 32], strides = [1, 1]} : vector<8x128xf32> to vector<8x32xf32>
    %152 = vector.extract_strided_slice %145 {offsets = [0, 64], sizes = [8, 32], strides = [1, 1]} : vector<8x128xf32> to vector<8x32xf32>
    %153 = vector.extract_strided_slice %149 {offsets = [0, 96], sizes = [8, 32], strides = [1, 1]} : vector<8x128xf32> to vector<8x32xf32>
    %154 = arith.mulf %151, %138 : vector<8x32xf32>
    %155 = arith.mulf %150, %152 : vector<8x32xf32>
    %156 = arith.addf %154, %155 : vector<8x32xf32>
    %157 = math.tanh %156 : vector<8x32xf32>
    %158 = arith.mulf %153, %157 : vector<8x32xf32>
    %159 = arith.truncf %158 : vector<8x32xf32> to vector<8x32xbf16>
    %cst_39 = arith.constant dense<0.000000e+00> : vector<8x128xf32>
    %160 = tpu.matmul %159, %5, %cst_39 {dimension_numbers = #tpu.dot_dimension_numbers<[1], [0], [0], [1], [0, 0, 1, 1], [], []>} : vector<8x32xbf16>, vector<32x128xbf16>, vector<8x128xf32> -> vector<8x128xf32>
    %161 = arith.addf %160, %11 : vector<8x128xf32>
    %162 = math.tanh %161 : vector<8x128xf32>
    %cst_40 = arith.constant 5.000000e-01 : f32
    %163 = vector.broadcast %cst_40 : f32 to vector<8x128xf32>
    %164 = arith.mulf %163, %162 : vector<8x128xf32>
    %cst_41 = arith.constant 5.000000e-01 : f32
    %165 = vector.broadcast %cst_41 : f32 to vector<8x128xf32>
    %166 = arith.addf %164, %165 : vector<8x128xf32>
    %167 = vector.extract_strided_slice %166 {offsets = [0, 0], sizes = [8, 32], strides = [1, 1]} : vector<8x128xf32> to vector<8x32xf32>
    %168 = vector.extract_strided_slice %166 {offsets = [0, 32], sizes = [8, 32], strides = [1, 1]} : vector<8x128xf32> to vector<8x32xf32>
    %169 = vector.extract_strided_slice %162 {offsets = [0, 64], sizes = [8, 32], strides = [1, 1]} : vector<8x128xf32> to vector<8x32xf32>
    %170 = vector.extract_strided_slice %166 {offsets = [0, 96], sizes = [8, 32], strides = [1, 1]} : vector<8x128xf32> to vector<8x32xf32>
    %171 = arith.mulf %168, %156 : vector<8x32xf32>
    %172 = arith.mulf %167, %169 : vector<8x32xf32>
    %173 = arith.addf %171, %172 : vector<8x32xf32>
    %174 = math.tanh %173 : vector<8x32xf32>
    %175 = arith.mulf %170, %174 : vector<8x32xf32>
    %176 = arith.truncf %175 : vector<8x32xf32> to vector<8x32xbf16>
    %cst_42 = arith.constant dense<0.000000e+00> : vector<8x128xf32>
    %177 = tpu.matmul %176, %5, %cst_42 {dimension_numbers = #tpu.dot_dimension_numbers<[1], [0], [0], [1], [0, 0, 1, 1], [], []>} : vector<8x32xbf16>, vector<32x128xbf16>, vector<8x128xf32> -> vector<8x128xf32>
    %178 = arith.addf %177, %11 : vector<8x128xf32>
    %179 = math.tanh %178 : vector<8x128xf32>
    %cst_43 = arith.constant 5.000000e-01 : f32
    %180 = vector.broadcast %cst_43 : f32 to vector<8x128xf32>
    %181 = arith.mulf %180, %179 : vector<8x128xf32>
    %cst_44 = arith.constant 5.000000e-01 : f32
    %182 = vector.broadcast %cst_44 : f32 to vector<8x128xf32>
    %183 = arith.addf %181, %182 : vector<8x128xf32>
    %184 = vector.extract_strided_slice %183 {offsets = [0, 0], sizes = [8, 32], strides = [1, 1]} : vector<8x128xf32> to vector<8x32xf32>
    %185 = vector.extract_strided_slice %183 {offsets = [0, 32], sizes = [8, 32], strides = [1, 1]} : vector<8x128xf32> to vector<8x32xf32>
    %186 = vector.extract_strided_slice %179 {offsets = [0, 64], sizes = [8, 32], strides = [1, 1]} : vector<8x128xf32> to vector<8x32xf32>
    %187 = vector.extract_strided_slice %183 {offsets = [0, 96], sizes = [8, 32], strides = [1, 1]} : vector<8x128xf32> to vector<8x32xf32>
    %188 = arith.mulf %185, %173 : vector<8x32xf32>
    %189 = arith.mulf %184, %186 : vector<8x32xf32>
    %190 = arith.addf %188, %189 : vector<8x32xf32>
    %191 = math.tanh %190 : vector<8x32xf32>
    %192 = arith.mulf %187, %191 : vector<8x32xf32>
    %193 = arith.truncf %192 : vector<8x32xf32> to vector<8x32xbf16>
    %cst_45 = arith.constant dense<0.000000e+00> : vector<8x128xf32>
    %194 = tpu.matmul %193, %5, %cst_45 {dimension_numbers = #tpu.dot_dimension_numbers<[1], [0], [0], [1], [0, 0, 1, 1], [], []>} : vector<8x32xbf16>, vector<32x128xbf16>, vector<8x128xf32> -> vector<8x128xf32>
    %195 = arith.addf %194, %11 : vector<8x128xf32>
    %196 = math.tanh %195 : vector<8x128xf32>
    %cst_46 = arith.constant 5.000000e-01 : f32
    %197 = vector.broadcast %cst_46 : f32 to vector<8x128xf32>
    %198 = arith.mulf %197, %196 : vector<8x128xf32>
    %cst_47 = arith.constant 5.000000e-01 : f32
    %199 = vector.broadcast %cst_47 : f32 to vector<8x128xf32>
    %200 = arith.addf %198, %199 : vector<8x128xf32>
    %201 = vector.extract_strided_slice %200 {offsets = [0, 0], sizes = [8, 32], strides = [1, 1]} : vector<8x128xf32> to vector<8x32xf32>
    %202 = vector.extract_strided_slice %200 {offsets = [0, 32], sizes = [8, 32], strides = [1, 1]} : vector<8x128xf32> to vector<8x32xf32>
    %203 = vector.extract_strided_slice %196 {offsets = [0, 64], sizes = [8, 32], strides = [1, 1]} : vector<8x128xf32> to vector<8x32xf32>
    %204 = vector.extract_strided_slice %200 {offsets = [0, 96], sizes = [8, 32], strides = [1, 1]} : vector<8x128xf32> to vector<8x32xf32>
    %205 = arith.mulf %202, %190 : vector<8x32xf32>
    %206 = arith.mulf %201, %203 : vector<8x32xf32>
    %207 = arith.addf %205, %206 : vector<8x32xf32>
    %208 = math.tanh %207 : vector<8x32xf32>
    %209 = arith.mulf %204, %208 : vector<8x32xf32>
    %210 = arith.truncf %209 : vector<8x32xf32> to vector<8x32xbf16>
    %cst_48 = arith.constant dense<0.000000e+00> : vector<8x128xf32>
    %211 = tpu.matmul %210, %5, %cst_48 {dimension_numbers = #tpu.dot_dimension_numbers<[1], [0], [0], [1], [0, 0, 1, 1], [], []>} : vector<8x32xbf16>, vector<32x128xbf16>, vector<8x128xf32> -> vector<8x128xf32>
    %212 = arith.addf %211, %11 : vector<8x128xf32>
    %213 = math.tanh %212 : vector<8x128xf32>
    %cst_49 = arith.constant 5.000000e-01 : f32
    %214 = vector.broadcast %cst_49 : f32 to vector<8x128xf32>
    %215 = arith.mulf %214, %213 : vector<8x128xf32>
    %cst_50 = arith.constant 5.000000e-01 : f32
    %216 = vector.broadcast %cst_50 : f32 to vector<8x128xf32>
    %217 = arith.addf %215, %216 : vector<8x128xf32>
    %218 = vector.extract_strided_slice %217 {offsets = [0, 0], sizes = [8, 32], strides = [1, 1]} : vector<8x128xf32> to vector<8x32xf32>
    %219 = vector.extract_strided_slice %217 {offsets = [0, 32], sizes = [8, 32], strides = [1, 1]} : vector<8x128xf32> to vector<8x32xf32>
    %220 = vector.extract_strided_slice %213 {offsets = [0, 64], sizes = [8, 32], strides = [1, 1]} : vector<8x128xf32> to vector<8x32xf32>
    %221 = vector.extract_strided_slice %217 {offsets = [0, 96], sizes = [8, 32], strides = [1, 1]} : vector<8x128xf32> to vector<8x32xf32>
    %222 = arith.mulf %219, %207 : vector<8x32xf32>
    %223 = arith.mulf %218, %220 : vector<8x32xf32>
    %224 = arith.addf %222, %223 : vector<8x32xf32>
    %225 = math.tanh %224 : vector<8x32xf32>
    %226 = arith.mulf %221, %225 : vector<8x32xf32>
    %227 = tpu.concatenate %175, %192, %209, %226 in 0 : vector<8x32xf32>, vector<8x32xf32>, vector<8x32xf32>, vector<8x32xf32> -> vector<32x32xf32>
    %228 = arith.truncf %227 : vector<32x32xf32> to vector<32x32xbf16>
    %cst_51 = arith.constant dense<0.000000e+00> : vector<32x128xf32>
    %229 = tpu.matmul %228, %7, %cst_51 {dimension_numbers = #tpu.dot_dimension_numbers<[1], [0], [0], [1], [0, 0, 1, 1], [], []>} : vector<32x32xbf16>, vector<32x128xbf16>, vector<32x128xf32> -> vector<32x128xf32>
    %230 = vector.broadcast %9 : vector<1x128xf32> to vector<32x128xf32>
    %231 = arith.addf %229, %230 : vector<32x128xf32>
    %232 = math.tanh %231 : vector<32x128xf32>
    %cst_52 = arith.constant 5.000000e-01 : f32
    %233 = vector.broadcast %cst_52 : f32 to vector<32x128xf32>
    %234 = arith.mulf %233, %232 : vector<32x128xf32>
    %cst_53 = arith.constant 5.000000e-01 : f32
    %235 = vector.broadcast %cst_53 : f32 to vector<32x128xf32>
    %236 = arith.addf %234, %235 : vector<32x128xf32>
    %c0_54 = arith.constant 0 : index
    %c0_55 = arith.constant 0 : index
    %c0_56 = arith.constant 0 : index
    %237 = vector.load %arg4[%c0_54, %c0_55, %c0_56] : memref<1x32x128xf32, #tpu.memory_space<vmem>>, vector<1x32x128xf32>
    %238 = vector.shape_cast %237 : vector<1x32x128xf32> to vector<32x128xf32>
    %239 = vector.shape_cast %236 : vector<32x128xf32> to vector<1x32x128xf32>
    tpu.vector_store %arg4[%c0_54, %c0_55, %c0_56], %239 {strides = array<i32>} : memref<1x32x128xf32, #tpu.memory_space<vmem>>, vector<1x32x128xf32>,
    return
  }
  func.func @transform_0(%arg0: i32) -> (i32, i32, i32) {
    %c0_i32 = arith.constant 0 : i32
    %c0_i32_0 = arith.constant 0 : i32
    %c0_i32_1 = arith.constant 0 : i32
    return %arg0, %c0_i32, %c0_i32_0 : i32, i32, i32
  }
  func.func @transform_1(%arg0: i32) -> (i32, i32, i32) {
    %c0_i32 = arith.constant 0 : i32
    %c0_i32_0 = arith.constant 0 : i32
    %c0_i32_1 = arith.constant 0 : i32
    %c0_i32_2 = arith.constant 0 : i32
    return %c0_i32, %c0_i32_0, %c0_i32_1 : i32, i32, i32
  }
  func.func @transform_2(%arg0: i32) -> (i32, i32) {
    %c0_i32 = arith.constant 0 : i32
    %c0_i32_0 = arith.constant 0 : i32
    %c0_i32_1 = arith.constant 0 : i32
    return %c0_i32, %c0_i32_0 : i32, i32
  }
  func.func @transform_3(%arg0: i32) -> (i32, i32, i32) {
    %c0_i32 = arith.constant 0 : i32
    %c0_i32_0 = arith.constant 0 : i32
    %c0_i32_1 = arith.constant 0 : i32
    return %arg0, %c0_i32, %c0_i32_0 : i32, i32, i32
  }
}

</mosaic_0001>

<llo_original>
// kernel: tpu_custom_call.1
$region0: #{tpu_custom_call.1}
  #allocation0 [shape = 'u32[]', space=smem, size = 0x4, offset = 0x4, fixed_abs, tag = 'smem constant byte address 0x4 - core index']
  #allocation1 [shape = 'u32[72,128]{1,0:T(1,128)}', space=vmem, size = 0x9000, scoped, tag = 'internal scratch']
  %s0 = inlined_call_operand.vmem [shape: bf16[1,64,32], index: 0, kind: input, shape index: {}]
  %s1 = inlined_call_operand.hbm [shape: bf16[4,32,128], index: 1, kind: input, shape index: {}]
  %s2 = inlined_call_operand.vmem [shape: f32[2,128], index: 2, kind: input, shape index: {}]
  %s3 = inlined_call_operand.hbm [shape: f32[1,32,128], index: 3, kind: output, shape index: {}]
  %s4 = sld [smem:[#allocation0]]
  $region26: #{tpu_custom_call.1} parent=0
    _
  %s6 = ssub.s32 1, %s4
  %s7 = scalar_select 0, %s6, %s4
  $region1: #{tpu_custom_call.1} parent=0
    #allocation2 [shape = 'u8[32768]{0}', space=vmem, size = 0x8000, scoped, tag = 'input window, operand 1, single buffered']
    #allocation3 [shape = 's32[1]{0}', space=sflag, size = 0x4, scoped, tag = 'scoped memory for tpu_custom_call.1']
    #allocation4 [shape = 's32[1]{0}', space=sflag, size = 0x4, scoped, tag = 'scoped memory for tpu_custom_call.1']
    #allocation5 [shape = 'u8[16384]{0}', space=vmem, size = 0x4000, scoped, tag = 'output window, operand 0, single buffered']
    %8 = vsyncpa [#allocation3], 0
    %9 = vsyncpa [#allocation4], 0
    // Predicated region
    $region2: #{tpu_custom_call.1} parent=1 // pred_check
      _
    $region3: #{tpu_custom_call.1} parent=1 // pred_check_branch
      %11 = sbr.rel (0) target = $region5
    $region4: #{tpu_custom_call.1} parent=1 // pred_region
      _
    $region5: #{tpu_custom_call.1} parent=1 // pred_fallthru
      _
    // Predicated region
    $region6: #{tpu_custom_call.1} parent=1 // pred_check
      _
    $region7: #{tpu_custom_call.1} parent=1 // pred_check_branch
      %13 = sbr.rel (0) target = $region9
    $region8: #{tpu_custom_call.1} parent=1 // pred_region
      %15 = vsyncadd [#allocation3], 0
      %s16 = sshll.u32 %s1, 4
      %s17 = int_to_ptr.hbm [resolvable:$true] %s16
      %s18 = sshll.u32 [#allocation2], 4
      %s19 = int_to_ptr.vmem [resolvable:$true] %s18
      %24 = dma.hbm_to_vmem [thread:$0]  %s17, 1024, %s19, [#allocation3], 64, 64, 4
    $region9: #{tpu_custom_call.1} parent=1 // pred_fallthru
      _
    // Predicated region
    $region10: #{tpu_custom_call.1} parent=1 // pred_check
      _
    $region11: #{tpu_custom_call.1} parent=1 // pred_check_branch
      %26 = sbr.rel (0) target = $region13
    $region12: #{tpu_custom_call.1} parent=1 // pred_region
      _
    $region13: #{tpu_custom_call.1} parent=1 // pred_fallthru
      _
    // Predicated region
    $region14: #{tpu_custom_call.1} parent=1 // pred_check
      _
    $region15: #{tpu_custom_call.1} parent=1 // pred_check_branch
      %28 = sbr.rel (0) target = $region17
    $region16: #{tpu_custom_call.1} parent=1 // pred_region
      %30 = dma.done [#allocation3], 1024
    $region17: #{tpu_custom_call.1} parent=1 // pred_fallthru
      _
    %v32 = vld [vmem:[#allocation2] sm:$0xf]
    %v33 = vld [vmem:[#allocation2 + $0x4] sm:$0xf]
    %v34 = vld [vmem:[#allocation2 + $0x8] sm:$0xf]
    %v35 = vld [vmem:[#allocation2 + $0xc] sm:$0xf]
    %s36 = scalar_lea.vmem [#allocation2], 16
    %v37 = vld [vmem:[%s36] sm:$0xf]
    %v38 = vld [vmem:[%s36 + $0x4] sm:$0xf]
    %v39 = vld [vmem:[%s36 + $0x8] sm:$0xf]
    %v40 = vld [vmem:[%s36 + $0xc] sm:$0xf]
    %s41 = scalar_lea.vmem [#allocation2], 32
    %v42 = vld [vmem:[%s41] sm:$0xf]
    %v43 = vld [vmem:[%s41 + $0x4] sm:$0xf]
    %v44 = vld [vmem:[%s41 + $0x8] sm:$0xf]
    %v45 = vld [vmem:[%s41 + $0xc] sm:$0xf]
    %s46 = scalar_lea.vmem [#allocation2], 48
    %v47 = vld [vmem:[%s46] sm:$0xf]
    %v48 = vld [vmem:[%s46 + $0x4] sm:$0xf]
    %v49 = vld [vmem:[%s46 + $0x8] sm:$0xf]
    %v50 = vld [vmem:[%s46 + $0xc] sm:$0xf]
    %v51 = vld [vmem:[%s2] sm:$0x1]
    %v52 = vld [vmem:[%s2 + $0x1] sm:$0x1]
    %v53 = vperm.slane %v51, 0
    %v54 = vld [vmem:[%s0] sm:$0xf]
    %v55 = vld [vmem:[%s0 + $0x4] sm:$0xf]
    %v56 = vld [vmem:[%s0 + $0x8] sm:$0xf]
    %v57 = vld [vmem:[%s0 + $0xc] sm:$0xf]
    %v58 = vld [vmem:[%s0 + $0x10] sm:$0xf]
    %v59 = vld [vmem:[%s0 + $0x14] sm:$0xf]
    %v60 = vld [vmem:[%s0 + $0x18] sm:$0xf]
    %v61 = vld [vmem:[%s0 + $0x1c] sm:$0xf]
    %v70 = vunpack.c.l.b16 %v54
    %v71 = vunpack.c.l.b16 %v55
    %v72 = vunpack.c.l.b16 %v56
    %v73 = vunpack.c.l.b16 %v57
    %v74 = vunpack.c.l.b16 %v58
    %v75 = vunpack.c.l.b16 %v59
    %v76 = vunpack.c.l.b16 %v60
    %v77 = vunpack.c.l.b16 %v61
    %v78 = vpack.c.b16 %v71, %v70
    %v79 = vpack.c.b16 %v73, %v72
    %v80 = vpack.c.b16 %v75, %v74
    %v81 = vpack.c.b16 %v77, %v76
    %v86 = vunpack.c.l.b16 %v32
    %v87 = vunpack.c.l.b16 %v33
    %v88 = vunpack.c.l.b16 %v34
    %v89 = vunpack.c.l.b16 %v35
    %v90 = vpack.c.b16 %v87, %v86
    %v91 = vpack.c.b16 %v89, %v88
    %vm94 = vcmask 261120
    %v96 = vsel %vm94, %v78, 0
    %v99 = vsel %vm94, %v79, 0
    %v102 = vsel %vm94, %v80, 0
    %v105 = vsel %vm94, %v81, 0
    %107 = vmatpush.bf16.msra.mxu0 0
    %108 = vmatpush.bf16.msra.mxu0 0
    %109 = vmatpush.bf16.msra.mxu0 0
    %110 = vmatpush.bf16.msra.mxu0 0
    %111 = vmatpush.bf16.msra.mxu0 0
    %112 = vmatpush.bf16.msra.mxu0 0
    %113 = vmatpush.bf16.msra.mxu0 %v91
    %114 = vmatpush.bf16.msra.mxu0 %v90
    %115 = vmatmul.bf16.gmra.mxu0 %v96
    %v116 = vpop.f32.mrf.mxu0
    %v117 = vadd.f32 %v53, %v116
    %v118 = vpop.f32.mrf.mxu0
    %v119 = vadd.f32 %v53, %v118
    %120 = vmatmul.bf16.gmra.mxu0 %v99
    %v121 = vpop.f32.mrf.mxu0
    %v122 = vadd.f32 %v53, %v121
    %v123 = vpop.f32.mrf.mxu0
    %v124 = vadd.f32 %v53, %v123
    %125 = vmatmul.bf16.gmra.mxu0 %v102
    %v126 = vpop.f32.mrf.mxu0
    %v127 = vadd.f32 %v53, %v126
    %v128 = vpop.f32.mrf.mxu0
    %v129 = vadd.f32 %v53, %v128
    %130 = vmatmul.bf16.gmra.mxu0 %v105
    %v131 = vpop.f32.mrf.mxu0
    %v132 = vadd.f32 %v53, %v131
    %v133 = vpop.f32.mrf.mxu0
    %v134 = vadd.f32 %v53, %v133
    %135 = vdwg.mxu0
    %v136 = vtanh.pop %v117
    %v137 = vmul.f32 %v136, 0.5
    %v138 = vadd.f32 %v137, 0.5
    %v139 = vmul.f32 %v138, 0.0
    %141 = vrot.lane.b32.xlu0 %v136, 64
    %v142 = vpop.permute.xlu0 %141
    %v144 = vmul.f32 %v138, %v142
    %146 = vrot.lane.b32.xlu0 %v144, 32
    %v147 = vpop.permute.xlu0 %146
    %v149 = vadd.f32 %v139, %v147
    %v150 = vtanh.pop %v149
    %152 = vrot.lane.b32.xlu0 %v150, 64
    %v153 = vpop.permute.xlu0 %152
    %v155 = vmul.f32 %v138, %v153
    %v156 = vpack.c.bf16 %v155, %v155
    %158 = vrot.lane.b32.xlu0 %v156, 32
    %v159 = vpop.permute.xlu0 %158
    %v164 = vunpack.c.l.b16 %v37
    %v165 = vunpack.c.l.b16 %v38
    %v166 = vunpack.c.l.b16 %v39
    %v167 = vunpack.c.l.b16 %v40
    %v168 = vpack.c.b16 %v165, %v164
    %v169 = vpack.c.b16 %v167, %v166
    %v173 = vsel %vm94, %v159, 0
    %175 = vmatpush.bf16.msra.mxu0 0
    %176 = vmatpush.bf16.msra.mxu0 0
    %177 = vmatpush.bf16.msra.mxu0 0
    %178 = vmatpush.bf16.msra.mxu0 0
    %179 = vmatpush.bf16.msra.mxu0 0
    %180 = vmatpush.bf16.msra.mxu0 0
    %181 = vmatpush.bf16.msra.mxu0 %v169
    %182 = vmatpush.bf16.msra.mxu0 %v168
    %183 = vmatmul.bf16.gmra.mxu0 %v173
    %v184 = vpop.f32.mrf.mxu0
    %v185 = vadd.f32 0.0, %v184
    %v186 = vpop.f32.mrf.mxu0
    %187 = vdwg.mxu0
    %v188 = vadd.f32 %v119, %v185
    %v189 = vtanh.pop %v188
    %v190 = vmul.f32 %v189, 0.5
    %v191 = vadd.f32 %v190, 0.5
    %v192 = vmul.f32 %v191, %v149
    %194 = vrot.lane.b32.xlu0 %v189, 64
    %v195 = vpop.permute.xlu0 %194
    %v197 = vmul.f32 %v191, %v195
    %199 = vrot.lane.b32.xlu0 %v197, 32
    %v200 = vpop.permute.xlu0 %199
    %v202 = vadd.f32 %v192, %v200
    %v203 = vtanh.pop %v202
    %205 = vrot.lane.b32.xlu0 %v203, 64
    %v206 = vpop.permute.xlu0 %205
    %v208 = vmul.f32 %v191, %v206
    %v209 = vpack.c.bf16 %v208, %v208
    %211 = vrot.lane.b32.xlu0 %v209, 32
    %v212 = vpop.permute.xlu0 %211
    %v214 = vsel %vm94, %v212, 0
    %216 = vmatpush.bf16.msra.mxu0 0
    %217 = vmatpush.bf16.msra.mxu0 0
    %218 = vmatpush.bf16.msra.mxu0 0
    %219 = vmatpush.bf16.msra.mxu0 0
    %220 = vmatpush.bf16.msra.mxu0 0
    %221 = vmatpush.bf16.msra.mxu0 0
    %222 = vmatpush.bf16.msra.mxu0 %v169
    %223 = vmatpush.bf16.msra.mxu0 %v168
    %224 = vmatmul.bf16.gmra.mxu0 %v214
    %v225 = vpop.f32.mrf.mxu0
    %v226 = vadd.f32 0.0, %v225
    %v227 = vpop.f32.mrf.mxu0
    %228 = vdwg.mxu0
    %v229 = vadd.f32 %v122, %v226
    %v230 = vtanh.pop %v229
    %v231 = vmul.f32 %v230, 0.5
    %v232 = vadd.f32 %v231, 0.5
    %v233 = vmul.f32 %v232, %v202
    %235 = vrot.lane.b32.xlu0 %v230, 64
    %v236 = vpop.permute.xlu0 %235
    %v238 = vmul.f32 %v232, %v236
    %240 = vrot.lane.b32.xlu0 %v238, 32
    %v241 = vpop.permute.xlu0 %240
    %v243 = vadd.f32 %v233, %v241
    %v244 = vtanh.pop %v243
    %246 = vrot.lane.b32.xlu0 %v244, 64
    %v247 = vpop.permute.xlu0 %246
    %v249 = vmul.f32 %v232, %v247
    %v250 = vpack.c.bf16 %v249, %v249
    %252 = vrot.lane.b32.xlu0 %v250, 32
    %v253 = vpop.permute.xlu0 %252
    %v255 = vsel %vm94, %v253, 0
    %257 = vmatpush.bf16.msra.mxu0 0
    %258 = vmatpush.bf16.msra.mxu0 0
    %259 = vmatpush.bf16.msra.mxu0 0
    %260 = vmatpush.bf16.msra.mxu0 0
    %261 = vmatpush.bf16.msra.mxu0 0
    %262 = vmatpush.bf16.msra.mxu0 0
    %263 = vmatpush.bf16.msra.mxu0 %v169
    %264 = vmatpush.bf16.msra.mxu0 %v168
    %265 = vmatmul.bf16.gmra.mxu0 %v255
    %v266 = vpop.f32.mrf.mxu0
    %v267 = vadd.f32 0.0, %v266
    %v268 = vpop.f32.mrf.mxu0
    %269 = vdwg.mxu0
    %v270 = vadd.f32 %v124, %v267
    %v271 = vtanh.pop %v270
    %v272 = vmul.f32 %v271, 0.5
    %v273 = vadd.f32 %v272, 0.5
    %v274 = vmul.f32 %v273, %v243
    %276 = vrot.lane.b32.xlu0 %v271, 64
    %v277 = vpop.permute.xlu0 %276
    %v279 = vmul.f32 %v273, %v277
    %281 = vrot.lane.b32.xlu0 %v279, 32
    %v282 = vpop.permute.xlu0 %281
    %v284 = vadd.f32 %v274, %v282
    %v285 = vtanh.pop %v284
    %287 = vrot.lane.b32.xlu0 %v285, 64
    %v288 = vpop.permute.xlu0 %287
    %v290 = vmul.f32 %v273, %v288
    %v291 = vpack.c.bf16 %v290, %v290
    %293 = vrot.lane.b32.xlu0 %v291, 32
    %v294 = vpop.permute.xlu0 %293
    %v296 = vsel %vm94, %v294, 0
    %298 = vmatpush.bf16.msra.mxu0 0
    %299 = vmatpush.bf16.msra.mxu0 0
    %300 = vmatpush.bf16.msra.mxu0 0
    %301 = vmatpush.bf16.msra.mxu0 0
    %302 = vmatpush.bf16.msra.mxu0 0
    %303 = vmatpush.bf16.msra.mxu0 0
    %304 = vmatpush.bf16.msra.mxu0 %v169
    %305 = vmatpush.bf16.msra.mxu0 %v168
    %306 = vmatmul.bf16.gmra.mxu0 %v296
    %v307 = vpop.f32.mrf.mxu0
    %v308 = vadd.f32 0.0, %v307
    %v309 = vpop.f32.mrf.mxu0
    %310 = vdwg.mxu0
    %v311 = vadd.f32 %v127, %v308
    %v312 = vtanh.pop %v311
    %v313 = vmul.f32 %v312, 0.5
    %v314 = vadd.f32 %v313, 0.5
    %v315 = vmul.f32 %v314, %v284
    %317 = vrot.lane.b32.xlu0 %v312, 64
    %v318 = vpop.permute.xlu0 %317
    %v320 = vmul.f32 %v314, %v318
    %322 = vrot.lane.b32.xlu0 %v320, 32
    %v323 = vpop.permute.xlu0 %322
    %v325 = vadd.f32 %v315, %v323
    %v326 = vtanh.pop %v325
    %328 = vrot.lane.b32.xlu0 %v326, 64
    %v329 = vpop.permute.xlu0 %328
    %v331 = vmul.f32 %v314, %v329
    %v332 = vpack.c.bf16 %v331, %v331
    %334 = vrot.lane.b32.xlu0 %v332, 32
    %v335 = vpop.permute.xlu0 %334
    %v337 = vsel %vm94, %v335, 0
    %339 = vmatpush.bf16.msra.mxu0 0
    %340 = vmatpush.bf16.msra.mxu0 0
    %341 = vmatpush.bf16.msra.mxu0 0
    %342 = vmatpush.bf16.msra.mxu0 0
    %343 = vmatpush.bf16.msra.mxu0 0
    %344 = vmatpush.bf16.msra.mxu0 0
    %345 = vmatpush.bf16.msra.mxu0 %v169
    %346 = vmatpush.bf16.msra.mxu0 %v168
    %347 = vmatmul.bf16.gmra.mxu0 %v337
    %v348 = vpop.f32.mrf.mxu0
    %v349 = vadd.f32 0.0, %v348
    %v350 = vpop.f32.mrf.mxu0
    %351 = vdwg.mxu0
    %v352 = vadd.f32 %v129, %v349
    %v353 = vtanh.pop %v352
    %v354 = vmul.f32 %v353, 0.5
    %v355 = vadd.f32 %v354, 0.5
    %v356 = vmul.f32 %v355, %v325
    %358 = vrot.lane.b32.xlu0 %v353, 64
    %v359 = vpop.permute.xlu0 %358
    %v361 = vmul.f32 %v355, %v359
    %363 = vrot.lane.b32.xlu0 %v361, 32
    %v364 = vpop.permute.xlu0 %363
    %v366 = vadd.f32 %v356, %v364
    %v367 = vtanh.pop %v366
    %369 = vrot.lane.b32.xlu0 %v367, 64
    %v370 = vpop.permute.xlu0 %369
    %v372 = vmul.f32 %v355, %v370
    %v373 = vpack.c.bf16 %v372, %v372
    %375 = vrot.lane.b32.xlu0 %v373, 32
    %v376 = vpop.permute.xlu0 %375
    %v378 = vsel %vm94, %v376, 0
    %380 = vmatpush.bf16.msra.mxu0 0
    %381 = vmatpush.bf16.msra.mxu0 0
    %382 = vmatpush.bf16.msra.mxu0 0
    %383 = vmatpush.bf16.msra.mxu0 0
    %384 = vmatpush.bf16.msra.mxu0 0
    %385 = vmatpush.bf16.msra.mxu0 0
    %386 = vmatpush.bf16.msra.mxu0 %v169
    %387 = vmatpush.bf16.msra.mxu0 %v168
    %388 = vmatmul.bf16.gmra.mxu0 %v378
    %v389 = vpop.f32.mrf.mxu0
    %v390 = vadd.f32 0.0, %v389
    %v391 = vpop.f32.mrf.mxu0
    %392 = vdwg.mxu0
    %v393 = vadd.f32 %v132, %v390
    %v394 = vtanh.pop %v393
    %v395 = vmul.f32 %v394, 0.5
    %v396 = vadd.f32 %v395, 0.5
    %v397 = vmul.f32 %v396, %v366
    %399 = vrot.lane.b32.xlu0 %v394, 64
    %v400 = vpop.permute.xlu0 %399
    %v402 = vmul.f32 %v396, %v400
    %404 = vrot.lane.b32.xlu0 %v402, 32
    %v405 = vpop.permute.xlu0 %404
    %v407 = vadd.f32 %v397, %v405
    %v408 = vtanh.pop %v407
    %410 = vrot.lane.b32.xlu0 %v408, 64
    %v411 = vpop.permute.xlu0 %410
    %v413 = vmul.f32 %v396, %v411
    %v414 = vpack.c.bf16 %v413, %v413
    %416 = vrot.lane.b32.xlu0 %v414, 32
    %v417 = vpop.permute.xlu0 %416
    %v419 = vsel %vm94, %v417, 0
    %421 = vmatpush.bf16.msra.mxu0 0
    %422 = vmatpush.bf16.msra.mxu0 0
    %423 = vmatpush.bf16.msra.mxu0 0
    %424 = vmatpush.bf16.msra.mxu0 0
    %425 = vmatpush.bf16.msra.mxu0 0
    %426 = vmatpush.bf16.msra.mxu0 0
    %427 = vmatpush.bf16.msra.mxu0 %v169
    %428 = vmatpush.bf16.msra.mxu0 %v168
    %429 = vmatmul.bf16.gmra.mxu0 %v419
    %v430 = vpop.f32.mrf.mxu0
    %v431 = vadd.f32 0.0, %v430
    %v432 = vpop.f32.mrf.mxu0
    %433 = vdwg.mxu0
    %v434 = vadd.f32 %v134, %v431
    %v435 = vtanh.pop %v434
    %v436 = vmul.f32 %v435, 0.5
    %v437 = vadd.f32 %v436, 0.5
    %v438 = vmul.f32 %v437, %v407
    %440 = vrot.lane.b32.xlu0 %v435, 64
    %v441 = vpop.permute.xlu0 %440
    %v443 = vmul.f32 %v437, %v441
    %445 = vrot.lane.b32.xlu0 %v443, 32
    %v446 = vpop.permute.xlu0 %445
    %v448 = vadd.f32 %v438, %v446
    %v449 = vtanh.pop %v448
    %451 = vrot.lane.b32.xlu0 %v449, 64
    %v452 = vpop.permute.xlu0 %451
    %v454 = vmul.f32 %v437, %v452
    %v455 = vpack.c.bf16 %v454, %v454
    %457 = vrot.lane.b32.xlu0 %v455, 32
    %v458 = vpop.permute.xlu0 %457
    %v463 = vunpack.c.l.b16 %v42
    %v464 = vunpack.c.l.b16 %v43
    %v465 = vunpack.c.l.b16 %v44
    %v466 = vunpack.c.l.b16 %v45
    %v467 = vpack.c.b16 %v464, %v463
    %v468 = vpack.c.b16 %v466, %v465
    %v472 = vsel %vm94, %v458, 0
    %474 = vmatpush.bf16.msra.mxu0 0
    %475 = vmatpush.bf16.msra.mxu0 0
    %476 = vmatpush.bf16.msra.mxu0 0
    %477 = vmatpush.bf16.msra.mxu0 0
    %478 = vmatpush.bf16.msra.mxu0 0
    %479 = vmatpush.bf16.msra.mxu0 0
    %480 = vmatpush.bf16.msra.mxu0 %v468
    %481 = vmatpush.bf16.msra.mxu0 %v467
    %482 = vmatmul.bf16.gmra.mxu0 %v472
    %v483 = vpop.f32.mrf.mxu0
    %v484 = vadd.f32 %v53, %v483
    %v485 = vpop.f32.mrf.mxu0
    %486 = vdwg.mxu0
    %v487 = vtanh.pop %v484
    %v488 = vmul.f32 %v487, 0.5
    %v489 = vadd.f32 %v488, 0.5
    %v490 = vmul.f32 %v489, %v448
    %492 = vrot.lane.b32.xlu0 %v487, 64
    %v493 = vpop.permute.xlu0 %492
    %v495 = vmul.f32 %v489, %v493
    %497 = vrot.lane.b32.xlu0 %v495, 32
    %v498 = vpop.permute.xlu0 %497
    %v500 = vadd.f32 %v490, %v498
    %v501 = vtanh.pop %v500
    %503 = vrot.lane.b32.xlu0 %v501, 64
    %v504 = vpop.permute.xlu0 %503
    %v506 = vmul.f32 %v489, %v504
    %v507 = vpack.c.bf16 %v506, %v506
    %509 = vrot.lane.b32.xlu0 %v507, 32
    %v510 = vpop.permute.xlu0 %509
    %v512 = vsel %vm94, %v510, 0
    %514 = vmatpush.bf16.msra.mxu0 0
    %515 = vmatpush.bf16.msra.mxu0 0
    %516 = vmatpush.bf16.msra.mxu0 0
    %517 = vmatpush.bf16.msra.mxu0 0
    %518 = vmatpush.bf16.msra.mxu0 0
    %519 = vmatpush.bf16.msra.mxu0 0
    %520 = vmatpush.bf16.msra.mxu0 %v468
    %521 = vmatpush.bf16.msra.mxu0 %v467
    %522 = vmatmul.bf16.gmra.mxu0 %v512
    %v523 = vpop.f32.mrf.mxu0
    %v524 = vadd.f32 %v53, %v523
    %v525 = vpop.f32.mrf.mxu0
    %526 = vdwg.mxu0
    %v527 = vtanh.pop %v524
    %v528 = vmul.f32 %v527, 0.5
    %v529 = vadd.f32 %v528, 0.5
    %v530 = vmul.f32 %v529, %v500
    %532 = vrot.lane.b32.xlu0 %v527, 64
    %v533 = vpop.permute.xlu0 %532
    %v535 = vmul.f32 %v529, %v533
    %537 = vrot.lane.b32.xlu0 %v535, 32
    %v538 = vpop.permute.xlu0 %537
    %v540 = vadd.f32 %v530, %v538
    %v541 = vtanh.pop %v540
    %543 = vrot.lane.b32.xlu0 %v541, 64
    %v544 = vpop.permute.xlu0 %543
    %v546 = vmul.f32 %v529, %v544
    %v547 = vpack.c.bf16 %v546, %v546
    %549 = vrot.lane.b32.xlu0 %v547, 32
    %v550 = vpop.permute.xlu0 %549
    %v552 = vsel %vm94, %v550, 0
    %554 = vmatpush.bf16.msra.mxu0 0
    %555 = vmatpush.bf16.msra.mxu0 0
    %556 = vmatpush.bf16.msra.mxu0 0
    %557 = vmatpush.bf16.msra.mxu0 0
    %558 = vmatpush.bf16.msra.mxu0 0
    %559 = vmatpush.bf16.msra.mxu0 0
    %560 = vmatpush.bf16.msra.mxu0 %v468
    %561 = vmatpush.bf16.msra.mxu0 %v467
    %562 = vmatmul.bf16.gmra.mxu0 %v552
    %v563 = vpop.f32.mrf.mxu0
    %v564 = vadd.f32 %v53, %v563
    %v565 = vpop.f32.mrf.mxu0
    %566 = vdwg.mxu0
    %v567 = vtanh.pop %v564
    %v568 = vmul.f32 %v567, 0.5
    %v569 = vadd.f32 %v568, 0.5
    %v570 = vmul.f32 %v569, %v540
    %572 = vrot.lane.b32.xlu0 %v567, 64
    %v573 = vpop.permute.xlu0 %572
    %v575 = vmul.f32 %v569, %v573
    %577 = vrot.lane.b32.xlu0 %v575, 32
    %v578 = vpop.permute.xlu0 %577
    %v580 = vadd.f32 %v570, %v578
    %v581 = vtanh.pop %v580
    %583 = vrot.lane.b32.xlu0 %v581, 64
    %v584 = vpop.permute.xlu0 %583
    %v586 = vmul.f32 %v569, %v584
    %v587 = vpack.c.bf16 %v586, %v586
    %589 = vrot.lane.b32.xlu0 %v587, 32
    %v590 = vpop.permute.xlu0 %589
    %v592 = vsel %vm94, %v590, 0
    %594 = vmatpush.bf16.msra.mxu0 0
    %595 = vmatpush.bf16.msra.mxu0 0
    %596 = vmatpush.bf16.msra.mxu0 0
    %597 = vmatpush.bf16.msra.mxu0 0
    %598 = vmatpush.bf16.msra.mxu0 0
    %599 = vmatpush.bf16.msra.mxu0 0
    %600 = vmatpush.bf16.msra.mxu0 %v468
    %601 = vmatpush.bf16.msra.mxu0 %v467
    %602 = vmatmul.bf16.gmra.mxu0 %v592
    %v603 = vpop.f32.mrf.mxu0
    %v604 = vadd.f32 %v53, %v603
    %v605 = vpop.f32.mrf.mxu0
    %606 = vdwg.mxu0
    %v607 = vtanh.pop %v604
    %v608 = vmul.f32 %v607, 0.5
    %v609 = vadd.f32 %v608, 0.5
    %v610 = vmul.f32 %v609, %v580
    %612 = vrot.lane.b32.xlu0 %v607, 64
    %v613 = vpop.permute.xlu0 %612
    %v615 = vmul.f32 %v609, %v613
    %617 = vrot.lane.b32.xlu0 %v615, 32
    %v618 = vpop.permute.xlu0 %617
    %v620 = vadd.f32 %v610, %v618
    %v621 = vtanh.pop %v620
    %623 = vrot.lane.b32.xlu0 %v621, 64
    %v624 = vpop.permute.xlu0 %623
    %v626 = vmul.f32 %v609, %v624
    %v627 = vpack.c.bf16 %v546, %v506
    %v628 = vpack.c.bf16 %v626, %v586
    %v629 = vperm.slane %v52, 0
    %632 = vrot.lane.b32.xlu0 %v627, 32
    %v633 = vpop.permute.xlu0 %632
    %634 = vrot.lane.b32.xlu0 %v628, 32
    %v635 = vpop.permute.xlu0 %634
    %v640 = vunpack.c.l.b16 %v47
    %v641 = vunpack.c.l.b16 %v48
    %v642 = vunpack.c.l.b16 %v49
    %v643 = vunpack.c.l.b16 %v50
    %v644 = vpack.c.b16 %v641, %v640
    %v645 = vpack.c.b16 %v643, %v642
    %v649 = vsel %vm94, %v633, 0
    %v652 = vsel %vm94, %v635, 0
    %654 = vmatpush.bf16.msra.mxu0 0
    %655 = vmatpush.bf16.msra.mxu0 0
    %656 = vmatpush.bf16.msra.mxu0 0
    %657 = vmatpush.bf16.msra.mxu0 0
    %658 = vmatpush.bf16.msra.mxu0 0
    %659 = vmatpush.bf16.msra.mxu0 0
    %660 = vmatpush.bf16.msra.mxu0 %v645
    %661 = vmatpush.bf16.msra.mxu0 %v644
    %662 = vmatmul.bf16.gmra.mxu0 %v649
    %v663 = vpop.f32.mrf.mxu0
    %v664 = vadd.f32 %v629, %v663
    %v665 = vpop.f32.mrf.mxu0
    %v666 = vadd.f32 %v629, %v665
    %667 = vmatmul.bf16.gmra.mxu0 %v652
    %v668 = vpop.f32.mrf.mxu0
    %v669 = vadd.f32 %v629, %v668
    %v670 = vpop.f32.mrf.mxu0
    %v671 = vadd.f32 %v629, %v670
    %672 = vdwg.mxu0
    %v673 = vtanh.pop %v664
    %v674 = vtanh.pop %v666
    %v675 = vtanh.pop %v669
    %v676 = vtanh.pop %v671
    %v677 = vmul.f32 %v673, 0.5
    %v678 = vmul.f32 %v674, 0.5
    %v679 = vmul.f32 %v675, 0.5
    %v680 = vmul.f32 %v676, 0.5
    %v681 = vadd.f32 %v677, 0.5
    %v682 = vadd.f32 %v678, 0.5
    %v683 = vadd.f32 %v679, 0.5
    %v684 = vadd.f32 %v680, 0.5
    %685 = vst [vmem:[#allocation5] sm:$0xff] %v681
    %686 = vst [vmem:[#allocation5 + $0x8] sm:$0xff] %v682
    %687 = vst [vmem:[#allocation5 + $0x10] sm:$0xff] %v683
    %688 = vst [vmem:[#allocation5 + $0x18] sm:$0xff] %v684
    // Predicated region
    $region18: #{tpu_custom_call.1} parent=1 // pred_check
      _
    $region19: #{tpu_custom_call.1} parent=1 // pred_check_branch
      %690 = sbr.rel (0) target = $region21
    $region20: #{tpu_custom_call.1} parent=1 // pred_region
      %692 = vsyncadd [#allocation4], 0
      %s693 = sshll.u32 [#allocation5], 4
      %s694 = int_to_ptr.vmem [resolvable:$true] %s693
      %s695 = sshll.u32 %s3, 4
      %s696 = int_to_ptr.hbm [resolvable:$true] %s695
      %701 = dma.vmem_to_hbm [thread:$0]  %s694, 512, %s696, [#allocation4], 128, 128, 8
    $region21: #{tpu_custom_call.1} parent=1 // pred_fallthru
      _
    // Predicated region
    $region22: #{tpu_custom_call.1} parent=1 // pred_check
      _
    $region23: #{tpu_custom_call.1} parent=1 // pred_check_branch
      %703 = sbr.rel (0) target = $region25
    $region24: #{tpu_custom_call.1} parent=1 // pred_region
      %705 = dma.done [#allocation4], 512
    $region25: #{tpu_custom_call.1} parent=1 // pred_fallthru
      _
    %706 = vsyncpa [#allocation3], 1
    %707 = vsyncpa [#allocation4], 1

</llo_original>
